<compile_context>
chip_gen: v5e
topology: v5e:2x2
jax: 0.10.0
libtpu: 0.0.40
codegen_flags: <defaults>
</compile_context>

<pallas_src>
import jax
import jax.numpy as jnp
import numpy as np
from jax import lax
from jax.experimental import pallas as pl
from jax.experimental.pallas import tpu as pltpu


def _vmem_capacity_bytes() -> int:
    """Best-effort physical VMEM query (falls back to 128 MiB = v5e/v6e)."""
    try:
        return int(pltpu.get_tpu_info().vmem_capacity_bytes)
    except Exception:
        return 128 * 1024 * 1024


def _make_attention_kernel(n_heads: int, head_dim: int, compute_dtype, approx_recip: bool):
    def kernel(xq_ref, kT_ref, v_ref, wq_ref, wout_ref, bout_ref, o_ref, o_acc_ref):
        # xq_ref:    (TQ, C)          query rows of the current batch element (compute_dtype)
        # kT_ref:    (H, D, KW)       pre-transposed key window for this batch element
        # v_ref:     (H, KW, D)       value window for this batch element
        # wq_ref:    (C, inner)       fused Q weight, scale pre-folded, compute_dtype
        # wout_ref:  (inner, C)       fused output-projection weight, compute_dtype
        # bout_ref:  (1, C)           output bias, f32
        # o_ref:     (TQ, C)          output tile
        # o_acc_ref: (TQ, inner)      VMEM scratch holding all head outputs
        bi = pl.program_id(0)                  # batch index (drives the mask)
        kw = kT_ref.shape[-1]

        # Additive mask row: key j allowed iff j <= bi.  (1, KW); broadcast
        # happens inside the add (no materialized (TQ, KW) temporary).
        j_idx = lax.broadcasted_iota(jnp.int32, (1, kw), 1)
        bias_row = jnp.where(j_idx <= bi, 0.0, -jnp.inf).astype(jnp.float32)

        # Fused Q projection: one wide (TQ, C) @ (C, inner) MXU matmul.
        q_all = jnp.dot(xq_ref[...], wq_ref[...],
                        preferred_element_type=jnp.float32).astype(compute_dtype)

        # Per-head score / softmax / PV.  H is small for this module, so a
        # fully-unrolled Python loop is fine (large H would want fori_loop).
        for h in range(n_heads):
            lo = h * head_dim
            qh = q_all[:, lo:lo + head_dim]                       # (TQ, D) static lane slice
            khT = kT_ref[h]                                       # (D, KW) pre-transposed
            vh = v_ref[h]                                         # (KW, D)

            dots = jnp.dot(qh, khT, preferred_element_type=jnp.float32)   # (TQ, KW)
            dots = dots + bias_row                                # sublane broadcast add

            # f32 softmax (elementwise math kept f32 on all chips).
            m = jnp.max(dots, axis=-1, keepdims=True)
            e = jnp.exp(dots - m)                                 # (TQ, KW)
            l = jnp.sum(e, axis=-1, keepdims=True)                # (TQ, 1)

            o_h = jnp.dot(e.astype(compute_dtype), vh,
                          preferred_element_type=jnp.float32)     # (TQ, D)
            if approx_recip:
                o_h = o_h * pl.reciprocal(l, approx=True)         # EUP slot (bf16 path)
            else:
                o_h = o_h / l                                     # exact (f32 reference path)

            o_acc_ref[:, lo:lo + head_dim] = o_h.astype(o_acc_ref.dtype)

        # Single fused output projection over all heads (K = inner for the MXU).
        out = jnp.dot(o_acc_ref[...], wout_ref[...],
                      preferred_element_type=jnp.float32)          # (TQ, C)
        o_ref[...] = (out + bout_ref[...]).astype(o_ref.dtype)

    return kernel


def attention_forward(x, w_qkv, w_out, b_out, *, n_heads: int, head_dim: int,
                      compute_dtype=jnp.bfloat16, q_tile=None):
    """Forward pass of the DALL-E `Attention` module (eval mode).

    x:     (B, N, C) f32                -- (batch, seq, n_embeddings)
    w_qkv: (3*n_heads*head_dim, C)      -- nn.Linear(C, 3*inner, bias=False).weight
    w_out: (C, n_heads*head_dim)        -- nn.Linear(inner, C).weight
    b_out: (C,)                         -- nn.Linear(inner, C).bias
    compute_dtype: dtype of MXU matmul operands (bf16 default / f32 debug path).
        Accumulation and softmax stay in f32.
    """
    x = jnp.asarray(x)
    B, N, C = x.shape
    inner = n_heads * head_dim
    assert w_qkv.shape == (3 * inner, C)
    assert w_out.shape == (C, inner)
    scale = float(C) ** (-0.5)                  # matches self.scale = n_embeddings ** -0.5
    compute_dtype = jnp.dtype(compute_dtype)
    approx_recip = compute_dtype == jnp.dtype(jnp.bfloat16)

    # ---- parameter / operand prep (all layout work kept outside the kernel) --
    w_qkv = jnp.asarray(w_qkv).astype(jnp.float32)
    wq, wk, wv = (w_qkv[i * inner:(i + 1) * inner] for i in range(3))   # (inner, C)

    # Mask structure: key j allowed only if j <= batch index <= B-1, so only the
    # first min(B, N) key rows ever contribute.  Pad the window to a LANE
    # multiple (128) for dense score/exp vregs; extra keys stay -inf masked.
    kw = min(B, N)
    kw_pad = min(-(-kw // 128) * 128, N)

    # Hoisted K/V window projection (depends only on b, not qi): tiny f32
    # einsums in the wrapper, then head-split; K pre-transposed to (B,H,D,KW).
    x_f32 = x.astype(jnp.float32)
    x_win = x_f32[:, :kw_pad, :]                                         # (B, KW, C)
    k_win = jnp.einsum('bnc,ic->bni', x_win, wk)                         # (B, KW, inner)
    v_win = jnp.einsum('bnc,ic->bni', x_win, wv)                         # (B, KW, inner)
    kT_h = (k_win.reshape(B, kw_pad, n_heads, head_dim)
            .transpose(0, 2, 3, 1).astype(compute_dtype))                # (B, H, D, KW)
    v_h = (v_win.reshape(B, kw_pad, n_heads, head_dim)
           .transpose(0, 2, 1, 3).astype(compute_dtype))                 # (B, H, KW, D)

    wq_all = (wq.T * scale).astype(compute_dtype)                        # (C, inner), scale folded
    wout_all = jnp.asarray(w_out).T.astype(compute_dtype)                # (inner, C)
    bout = jnp.asarray(b_out).reshape(1, C).astype(jnp.float32)

    xq = x_f32.astype(compute_dtype)   # pre-cast query stream (halves DMA on bf16 path)

    # ---- generation-aware tiling --------------------------------------------
    vmem_cap = _vmem_capacity_bytes()
    small_vmem = vmem_cap <= 64 * 1024 * 1024         # v7x: 64 MiB per TensorCore
    vmem_limit = (48 if small_vmem else 64) * 1024 * 1024
    if q_tile is None:
        q_tile = 256 if small_vmem else 512           # v6e users may pass q_tile=1024
    tq = min(int(q_tile), N)
    if tq != N and tq % 8 != 0:                       # block-shape rule: /8 or full dim
        tq = N
    if N % tq != 0:                                   # prefer a tile that divides N
        cand = tq - (tq % 8)
        while cand >= 8 and not (cand % 8 == 0 and N % cand == 0):
            cand -= 8
        tq = cand if (cand >= 8 and N % cand == 0) else N
    nq = pl.cdiv(N, tq)
    # Keep both TensorCores of a 2-TC chip busy when the grid would be 1 step.
    if B * nq < 2 and N >= 16 and N % 16 == 0:
        tq = N // 2
        nq = 2

    kernel = _make_attention_kernel(n_heads, head_dim, compute_dtype, approx_recip)

    grid_spec = pltpu.PrefetchScalarGridSpec(
        num_scalar_prefetch=0,
        grid=(B, nq),
        in_specs=[
            pl.BlockSpec((pl.Squeezed(), tq, C), lambda b, qi: (b, qi, 0)),                    # x: query rows
            pl.BlockSpec((pl.Squeezed(), n_heads, head_dim, kw_pad), lambda b, qi: (b, 0, 0, 0)),  # K^T window
            pl.BlockSpec((pl.Squeezed(), n_heads, kw_pad, head_dim), lambda b, qi: (b, 0, 0, 0)),  # V window
            pl.BlockSpec((C, inner), lambda b, qi: (0, 0)),                                    # Wq (fused, scaled)
            pl.BlockSpec((inner, C), lambda b, qi: (0, 0)),                                    # Wout (fused)
            pl.BlockSpec((1, C), lambda b, qi: (0, 0)),                                        # bias
        ],
        out_specs=pl.BlockSpec((pl.Squeezed(), tq, C), lambda b, qi: (b, qi, 0)),
        scratch_shapes=[pltpu.VMEM((tq, inner), compute_dtype)],                                # per-step head outputs
    )

    return pl.pallas_call(
        kernel,
        out_shape=jax.ShapeDtypeStruct((B, N, C), x.dtype),
        grid_spec=grid_spec,
        compiler_params=pltpu.CompilerParams(
            dimension_semantics=("parallel", "parallel"),
            vmem_limit_bytes=vmem_limit,
        ),
    )(xq, kT_h, v_h, wq_all, wout_all, bout)


def attention_reference(x, w_qkv, w_out, b_out, *, n_heads: int, head_dim: int):
    """Pure-JAX mirror of the PyTorch forward (eval mode)."""
    B, N, C = x.shape
    inner = n_heads * head_dim
    scale = float(C) ** (-0.5)

    qkv = jnp.einsum('bnc,oc->bno', x, w_qkv)                  # (B, N, 3*inner)
    q, k, v = jnp.split(qkv, 3, axis=-1)

    def split_heads(t):
        return t.reshape(B, N, n_heads, head_dim).transpose(0, 2, 1, 3)  # (B, H, N, D)

    q, k, v = map(split_heads, (q, k, v))
    dots = jnp.einsum('bhid,bhjd->bhij', q, k) * scale         # (B, H, N, N)

    # mask[bi, j] = 1 iff j <= bi ; rearranged 'b j -> b () () j'
    mask = (jnp.arange(N)[None, :] <= jnp.arange(B)[:, None])  # (B, N)
    dots = jnp.where(mask[:, None, None, :], dots, -jnp.inf)

    attn = jax.nn.softmax(dots, axis=-1)
    out = jnp.einsum('bhij,bhjd->bhid', attn, v)               # (B, H, N, D)
    out = out.transpose(0, 2, 1, 3).reshape(B, N, inner)       # (B, N, inner)
    out = jnp.einsum('bni,ci->bnc', out, w_out) + b_out        # (B, N, C)
    return out


if __name__ == "__main__":
    # small, module-consistent shapes: batch=2, seq=8, n_embeddings=32
    B, N, C = 2, 8, 32
    N_HEADS, HEAD_DIM = 2, 16
    INNER = N_HEADS * HEAD_DIM

    key = jax.random.PRNGKey(0)
    kx, kq, ko, kb = jax.random.split(key, 4)

    x = jax.random.normal(kx, (B, N, C), dtype=jnp.float32)
    # deterministic "parameters" (shapes match nn.Linear weights: (out, in))
    w_qkv = jax.random.normal(kq, (3 * INNER, C), dtype=jnp.float32) * 0.1
    w_out = jax.random.normal(ko, (C, INNER), dtype=jnp.float32) * 0.1
    b_out = jax.random.normal(kb, (C,), dtype=jnp.float32) * 0.1

    ref = attention_reference(x, w_qkv, w_out, b_out, n_heads=N_HEADS, head_dim=HEAD_DIM)

    # f32 debug path: tight tolerance.
    out = attention_forward(x, w_qkv, w_out, b_out, n_heads=N_HEADS, head_dim=HEAD_DIM,
                            compute_dtype=jnp.float32)
    out = jax.block_until_ready(out)
    np.testing.assert_allclose(np.asarray(out), np.asarray(ref), rtol=1e-4, atol=1e-4)

    # bf16 MXU fast path (default: f32 accumulation + f32 softmax), looser tolerance.
    out_bf16 = attention_forward(x, w_qkv, w_out, b_out, n_heads=N_HEADS, head_dim=HEAD_DIM)
    out_bf16 = jax.block_until_ready(out_bf16)
    np.testing.assert_allclose(np.asarray(out_bf16), np.asarray(ref), rtol=5e-2, atol=5e-2)

    print("KERNEL_OK")
</pallas_src>

<mosaic_0001>
module attributes {stable_mosaic.version = 11 : i64} {
  func.func @kernel(%arg0: i32, %arg1: i32, %arg2: memref<1x8x32xf32, #tpu.memory_space<vmem>>, %arg3: memref<1x2x16x8xf32, #tpu.memory_space<vmem>>, %arg4: memref<1x2x8x16xf32, #tpu.memory_space<vmem>>, %arg5: memref<32x32xf32, #tpu.memory_space<vmem>>, %arg6: memref<32x32xf32, #tpu.memory_space<vmem>>, %arg7: memref<1x32xf32, #tpu.memory_space<vmem>>, %arg8: memref<1x8x32xf32, #tpu.memory_space<vmem>>, %arg9: memref<8x32xf32, #tpu.memory_space<vmem>>) attributes {dimension_semantics = [#tpu.dimension_semantics<parallel>, #tpu.dimension_semantics<parallel>], iteration_bounds = array<i64: 2, 1>, scalar_prefetch = 0 : i64, scratch_operands = 1 : i64, tpu.core_type = #tpu.core_type<tc>, window_params = [{transform_indices = @transform_0, window_bounds = array<i64: 1, 8, 32>}, {transform_indices = @transform_1, window_bounds = array<i64: 1, 2, 16, 8>}, {transform_indices = @transform_2, window_bounds = array<i64: 1, 2, 8, 16>}, {pipeline_mode = #tpu.pipeline_mode<synchronous>, transform_indices = @transform_3, window_bounds = array<i64: 32, 32>}, {pipeline_mode = #tpu.pipeline_mode<synchronous>, transform_indices = @transform_4, window_bounds = array<i64: 32, 32>}, {pipeline_mode = #tpu.pipeline_mode<synchronous>, transform_indices = @transform_5, window_bounds = array<i64: 1, 32>}, {transform_indices = @transform_6, window_bounds = array<i64: 1, 8, 32>}]} {
    %0 = tpu.iota {dimensions = array<i32: 1>} : vector<1x8xi32>
    %1 = vector.broadcast %arg0 : i32 to vector<1x8xi32>
    %2 = arith.cmpi sle, %0, %1 : vector<1x8xi32>
    %cst = arith.constant 0.000000e+00 : f32
    %cst_0 = arith.constant 0xFF800000 : f32
    %3 = vector.broadcast %cst : f32 to vector<1x8xf32>
    %4 = vector.broadcast %cst_0 : f32 to vector<1x8xf32>
    %5 = arith.select %2, %3, %4 : vector<1x8xi1>, vector<1x8xf32>
    %c0 = arith.constant 0 : index
    %c0_1 = arith.constant 0 : index
    %c0_2 = arith.constant 0 : index
    %6 = vector.load %arg2[%c0, %c0_1, %c0_2] : memref<1x8x32xf32, #tpu.memory_space<vmem>>, vector<1x8x32xf32>
    %7 = vector.shape_cast %6 : vector<1x8x32xf32> to vector<8x32xf32>
    %c0_3 = arith.constant 0 : index
    %c0_4 = arith.constant 0 : index
    %8 = vector.load %arg5[%c0_3, %c0_4] : memref<32x32xf32, #tpu.memory_space<vmem>>, vector<32x32xf32>
    %cst_5 = arith.constant dense<0.000000e+00> : vector<8x32xf32>
    %9 = tpu.matmul %7, %8, %cst_5 {dimension_numbers = #tpu.dot_dimension_numbers<[1], [0], [0], [1], [0, 0, 1, 1], [], []>} : vector<8x32xf32>, vector<32x32xf32>, vector<8x32xf32> -> vector<8x32xf32>
    %10 = vector.extract_strided_slice %9 {offsets = [0, 0], sizes = [8, 16], strides = [1, 1]} : vector<8x32xf32> to vector<8x16xf32>
    %c0_6 = arith.constant 0 : index
    %c0_7 = arith.constant 0 : index
    %c0_8 = arith.constant 0 : index
    %c0_9 = arith.constant 0 : index
    %11 = vector.load %arg3[%c0_6, %c0_7, %c0_8, %c0_9] : memref<1x2x16x8xf32, #tpu.memory_space<vmem>>, vector<1x1x16x8xf32>
    %12 = vector.shape_cast %11 : vector<1x1x16x8xf32> to vector<16x8xf32>
    %c0_10 = arith.constant 0 : index
    %c0_11 = arith.constant 0 : index
    %c0_12 = arith.constant 0 : index
    %c0_13 = arith.constant 0 : index
    %13 = vector.load %arg4[%c0_10, %c0_11, %c0_12, %c0_13] : memref<1x2x8x16xf32, #tpu.memory_space<vmem>>, vector<1x1x8x16xf32>
    %14 = vector.shape_cast %13 : vector<1x1x8x16xf32> to vector<8x16xf32>
    %cst_14 = arith.constant dense<0.000000e+00> : vector<8x8xf32>
    %15 = tpu.matmul %10, %12, %cst_14 {dimension_numbers = #tpu.dot_dimension_numbers<[1], [0], [0], [1], [0, 0, 1, 1], [], []>} : vector<8x16xf32>, vector<16x8xf32>, vector<8x8xf32> -> vector<8x8xf32>
    %16 = vector.broadcast %5 : vector<1x8xf32> to vector<8x8xf32>
    %17 = arith.addf %15, %16 : vector<8x8xf32>
    %cst_15 = arith.constant dense<0xFF800000> : vector<8xf32>
    %18 = vector.multi_reduction <maximumf>, %17, %cst_15 [1] : vector<8x8xf32> to vector<8xf32>
    %19 = vector.shape_cast %18 : vector<8xf32> to vector<8x1xf32>
    %20 = vector.broadcast %19 : vector<8x1xf32> to vector<8x8xf32>
    %21 = arith.subf %17, %20 : vector<8x8xf32>
    %22 = math.exp %21 : vector<8x8xf32>
    %cst_16 = arith.constant dense<0.000000e+00> : vector<8xf32>
    %23 = vector.multi_reduction <add>, %22, %cst_16 [1] : vector<8x8xf32> to vector<8xf32>
    %24 = vector.shape_cast %23 : vector<8xf32> to vector<8x1xf32>
    %cst_17 = arith.constant dense<0.000000e+00> : vector<8x16xf32>
    %25 = tpu.matmul %22, %14, %cst_17 {dimension_numbers = #tpu.dot_dimension_numbers<[1], [0], [0], [1], [0, 0, 1, 1], [], []>} : vector<8x8xf32>, vector<8x16xf32>, vector<8x16xf32> -> vector<8x16xf32>
    %26 = vector.broadcast %24 : vector<8x1xf32> to vector<8x16xf32>
    %27 = arith.divf %25, %26 : vector<8x16xf32>
    %c0_18 = arith.constant 0 : index
    %c0_19 = arith.constant 0 : index
    %28 = vector.load %arg9[%c0_18, %c0_19] : memref<8x32xf32, #tpu.memory_space<vmem>>, vector<8x16xf32>
    tpu.vector_store %arg9[%c0_18, %c0_19], %27 {strides = array<i32>} : memref<8x32xf32, #tpu.memory_space<vmem>>, vector<8x16xf32>,
    %29 = vector.extract_strided_slice %9 {offsets = [0, 16], sizes = [8, 16], strides = [1, 1]} : vector<8x32xf32> to vector<8x16xf32>
    %c0_20 = arith.constant 0 : index
    %c1 = arith.constant 1 : index
    %c0_21 = arith.constant 0 : index
    %c0_22 = arith.constant 0 : index
    %30 = vector.load %arg3[%c0_20, %c1, %c0_21, %c0_22] : memref<1x2x16x8xf32, #tpu.memory_space<vmem>>, vector<1x1x16x8xf32>
    %31 = vector.shape_cast %30 : vector<1x1x16x8xf32> to vector<16x8xf32>
    %c0_23 = arith.constant 0 : index
    %c1_24 = arith.constant 1 : index
    %c0_25 = arith.constant 0 : index
    %c0_26 = arith.constant 0 : index
    %32 = vector.load %arg4[%c0_23, %c1_24, %c0_25, %c0_26] : memref<1x2x8x16xf32, #tpu.memory_space<vmem>>, vector<1x1x8x16xf32>
    %33 = vector.shape_cast %32 : vector<1x1x8x16xf32> to vector<8x16xf32>
    %cst_27 = arith.constant dense<0.000000e+00> : vector<8x8xf32>
    %34 = tpu.matmul %29, %31, %cst_27 {dimension_numbers = #tpu.dot_dimension_numbers<[1], [0], [0], [1], [0, 0, 1, 1], [], []>} : vector<8x16xf32>, vector<16x8xf32>, vector<8x8xf32> -> vector<8x8xf32>
    %35 = vector.broadcast %5 : vector<1x8xf32> to vector<8x8xf32>
    %36 = arith.addf %34, %35 : vector<8x8xf32>
    %cst_28 = arith.constant dense<0xFF800000> : vector<8xf32>
    %37 = vector.multi_reduction <maximumf>, %36, %cst_28 [1] : vector<8x8xf32> to vector<8xf32>
    %38 = vector.shape_cast %37 : vector<8xf32> to vector<8x1xf32>
    %39 = vector.broadcast %38 : vector<8x1xf32> to vector<8x8xf32>
    %40 = arith.subf %36, %39 : vector<8x8xf32>
    %41 = math.exp %40 : vector<8x8xf32>
    %cst_29 = arith.constant dense<0.000000e+00> : vector<8xf32>
    %42 = vector.multi_reduction <add>, %41, %cst_29 [1] : vector<8x8xf32> to vector<8xf32>
    %43 = vector.shape_cast %42 : vector<8xf32> to vector<8x1xf32>
    %cst_30 = arith.constant dense<0.000000e+00> : vector<8x16xf32>
    %44 = tpu.matmul %41, %33, %cst_30 {dimension_numbers = #tpu.dot_dimension_numbers<[1], [0], [0], [1], [0, 0, 1, 1], [], []>} : vector<8x8xf32>, vector<8x16xf32>, vector<8x16xf32> -> vector<8x16xf32>
    %45 = vector.broadcast %43 : vector<8x1xf32> to vector<8x16xf32>
    %46 = arith.divf %44, %45 : vector<8x16xf32>
    %c0_31 = arith.constant 0 : index
    %c16 = arith.constant 16 : index
    %47 = vector.load %arg9[%c0_31, %c16] : memref<8x32xf32, #tpu.memory_space<vmem>>, vector<8x16xf32>
    tpu.vector_store %arg9[%c0_31, %c16], %46 {strides = array<i32>} : memref<8x32xf32, #tpu.memory_space<vmem>>, vector<8x16xf32>,
    %c0_32 = arith.constant 0 : index
    %c0_33 = arith.constant 0 : index
    %48 = vector.load %arg9[%c0_32, %c0_33] : memref<8x32xf32, #tpu.memory_space<vmem>>, vector<8x32xf32>
    %c0_34 = arith.constant 0 : index
    %c0_35 = arith.constant 0 : index
    %49 = vector.load %arg6[%c0_34, %c0_35] : memref<32x32xf32, #tpu.memory_space<vmem>>, vector<32x32xf32>
    %cst_36 = arith.constant dense<0.000000e+00> : vector<8x32xf32>
    %50 = tpu.matmul %48, %49, %cst_36 {dimension_numbers = #tpu.dot_dimension_numbers<[1], [0], [0], [1], [0, 0, 1, 1], [], []>} : vector<8x32xf32>, vector<32x32xf32>, vector<8x32xf32> -> vector<8x32xf32>
    %c0_37 = arith.constant 0 : index
    %c0_38 = arith.constant 0 : index
    %51 = vector.load %arg7[%c0_37, %c0_38] : memref<1x32xf32, #tpu.memory_space<vmem>>, vector<1x32xf32>
    %52 = vector.broadcast %51 : vector<1x32xf32> to vector<8x32xf32>
    %53 = arith.addf %50, %52 : vector<8x32xf32>
    %c0_39 = arith.constant 0 : index
    %c0_40 = arith.constant 0 : index
    %c0_41 = arith.constant 0 : index
    %54 = vector.load %arg8[%c0_39, %c0_40, %c0_41] : memref<1x8x32xf32, #tpu.memory_space<vmem>>, vector<1x8x32xf32>
    %55 = vector.shape_cast %54 : vector<1x8x32xf32> to vector<8x32xf32>
    %56 = vector.shape_cast %53 : vector<8x32xf32> to vector<1x8x32xf32>
    tpu.vector_store %arg8[%c0_39, %c0_40, %c0_41], %56 {strides = array<i32>} : memref<1x8x32xf32, #tpu.memory_space<vmem>>, vector<1x8x32xf32>,
    return
  }
  func.func @transform_0(%arg0: i32, %arg1: i32) -> (i32, i32, i32) {
    %c0_i32 = arith.constant 0 : i32
    %c0_i32_0 = arith.constant 0 : i32
    return %arg0, %arg1, %c0_i32 : i32, i32, i32
  }
  func.func @transform_1(%arg0: i32, %arg1: i32) -> (i32, i32, i32, i32) {
    %c0_i32 = arith.constant 0 : i32
    %c0_i32_0 = arith.constant 0 : i32
    %c0_i32_1 = arith.constant 0 : i32
    %c0_i32_2 = arith.constant 0 : i32
    return %arg0, %c0_i32, %c0_i32_0, %c0_i32_1 : i32, i32, i32, i32
  }
  func.func @transform_2(%arg0: i32, %arg1: i32) -> (i32, i32, i32, i32) {
    %c0_i32 = arith.constant 0 : i32
    %c0_i32_0 = arith.constant 0 : i32
    %c0_i32_1 = arith.constant 0 : i32
    %c0_i32_2 = arith.constant 0 : i32
    return %arg0, %c0_i32, %c0_i32_0, %c0_i32_1 : i32, i32, i32, i32
  }
  func.func @transform_3(%arg0: i32, %arg1: i32) -> (i32, i32) {
    %c0_i32 = arith.constant 0 : i32
    %c0_i32_0 = arith.constant 0 : i32
    %c0_i32_1 = arith.constant 0 : i32
    return %c0_i32, %c0_i32_0 : i32, i32
  }
  func.func @transform_4(%arg0: i32, %arg1: i32) -> (i32, i32) {
    %c0_i32 = arith.constant 0 : i32
    %c0_i32_0 = arith.constant 0 : i32
    %c0_i32_1 = arith.constant 0 : i32
    return %c0_i32, %c0_i32_0 : i32, i32
  }
  func.func @transform_5(%arg0: i32, %arg1: i32) -> (i32, i32) {
    %c0_i32 = arith.constant 0 : i32
    %c0_i32_0 = arith.constant 0 : i32
    %c0_i32_1 = arith.constant 0 : i32
    return %c0_i32, %c0_i32_0 : i32, i32
  }
  func.func @transform_6(%arg0: i32, %arg1: i32) -> (i32, i32, i32) {
    %c0_i32 = arith.constant 0 : i32
    %c0_i32_0 = arith.constant 0 : i32
    return %arg0, %arg1, %c0_i32 : i32, i32, i32
  }
}

</mosaic_0001>

<llo_original>
// kernel: tpu_custom_call.1
$region0: #{tpu_custom_call.1}
  #allocation0 [shape = 'u32[]', space=smem, size = 0x4, offset = 0x4, fixed_abs, tag = 'smem constant byte address 0x4 - core index']
  #allocation1 [shape = 'u32[72,128]{1,0:T(1,128)}', space=vmem, size = 0x9000, scoped, tag = 'internal scratch']
  #allocation2 [shape = 'f32[8,32]{1,0:T(8,128)}', space=vmem, size = 0x1000, scoped, tag = 'scratch operand']
  %s0 = inlined_call_operand.hbm [shape: f32[2,8,32], index: 0, kind: input, shape index: {}]
  %s1 = inlined_call_operand.vmem [shape: f32[2,2,16,8], index: 1, kind: input, shape index: {}]
  %s2 = inlined_call_operand.vmem [shape: f32[2,2,8,16], index: 2, kind: input, shape index: {}]
  %s3 = inlined_call_operand.vmem [shape: f32[32,32], index: 3, kind: input, shape index: {}]
  %s4 = inlined_call_operand.vmem [shape: f32[32,32], index: 4, kind: input, shape index: {}]
  %s5 = inlined_call_operand.vmem [shape: f32[1,32], index: 5, kind: input, shape index: {}]
  %s6 = inlined_call_operand.hbm [shape: f32[2,8,32], index: 6, kind: output, shape index: {}]
  %s7 = sld [smem:[#allocation0]]
  $region61: #{tpu_custom_call.1} parent=0
    _
  %s9 = ssub.s32 1, %s7
  %s10 = scalar_select 0, %s9, %s7
  $region1: #{tpu_custom_call.1} parent=0
    #allocation3 [shape = 'u8[8192]{0}', space=vmem, size = 0x2000, scoped, tag = 'input window, operand 0']
    #allocation4 [shape = 's32[2]{0}', space=sflag, size = 0x8, scoped, tag = 'scoped memory for tpu_custom_call.1']
    #allocation5 [shape = 's32[2]{0}', space=sflag, size = 0x8, scoped, tag = 'scoped memory for tpu_custom_call.1']
    #allocation6 [shape = 'u8[8192]{0}', space=vmem, size = 0x2000, scoped, tag = 'output window, operand 0']
    %11 = vsyncpa [#allocation4], 0
    %s12 = scalar_lea.sflag [#allocation4], 1
    %13 = vsyncpa %s12, 0
    %14 = vsyncpa [#allocation5], 0
    %s15 = scalar_lea.sflag [#allocation5], 1
    %16 = vsyncpa %s15, 0
    loop: start=0, step=1, limit=4
    $region2: #{tpu_custom_call.1} parent=1 // loop_pre_header
      _
    $region3: #{tpu_custom_call.1} parent=1 // loop_header
      %s18 = sphi 0, %s22
      %p19 = scmp.ge.s32.totalorder %s18, 4
      %s25 = sphi 0, %s37
      %s26 = sphi 0, %s33
      %s27 = sphi 0, %s25
      %s28 = sphi 0, %s26
      %s29 = sphi 0, %s27
      %s30 = sphi 0, %s28
      %s42 = sphi 0, %s44
      %s45 = sphi 0, %s42
      %s46 = sphi 0, %s45
      %s62 = sphi 0, %s46
      %s68 = sphi 0, %s70
      %s71 = sphi 0, %s68
      %s72 = sphi 0, %s71
      %s88 = sphi 0, %s72
      %s94 = sphi 0, %s96
      %s97 = sphi 0, %s94
      %s98 = sphi 0, %s97
      %s114 = sphi 0, %s98
      %s118 = sphi 0, %s118
      %s120 = sphi 0, %s118
      %s121 = sphi 0, %s120
      %s135 = sphi 0, %s121
      %s139 = sphi 0, %s139
      %s141 = sphi 0, %s139
      %s142 = sphi 0, %s141
      %s156 = sphi 0, %s142
      %s160 = sphi 0, %s160
      %s162 = sphi 0, %s160
      %s163 = sphi 0, %s162
      %s177 = sphi 0, %s163
      %s185 = sphi 0, %s187
      %s188 = sphi 0, %s185
      %s189 = sphi 0, %s188
      %s205 = sphi 0, %s189
    $region4: #{tpu_custom_call.1} parent=1 // loop_header_branch
      %21 = sbr.rel (%p19) target = $region8
    $region5: #{tpu_custom_call.1} parent=1 // loop_body
      %s23 = ssub.s32 %s18, 1
      %s24 = ssub.s32 %s18, 2
      %s31 = sadd.s32 1, %s26
      %p32 = scmp.ge.s32.totalorder %s31, 1
      %s33 = scalar_select %p32, 0, %s31
      %s34 = sadd.s32 1, %s25
      %s35 = scalar_select %p32, %s34, %s25
      %p36 = scmp.ge.s32.totalorder %s35, 2
      %s37 = scalar_select %p36, 0, %s35
      %s38 = ssub.s32 %s25, %s37
      %s39 = ssub.s32 %s26, %s33
      %s40 = sor.u32 %s38, %s39
      %p41 = scmp.eq.s32.totalorder %s40, 0
      %s43 = sadd.s32 %s42, 1
      %s44 = scalar_select %p41, %s42, %s43
      %p47 = pneg %p41
      %p48 = scmp.eq.s32.totalorder %s18, 1
      %p49 = por %p47, %p48
      %p50 = scmp.ne.s32.totalorder %s42, %s45
      %p51 = scmp.eq.s32.totalorder %s18, 0
      %p52 = por %p50, %p51
      %p53 = scmp.ne.s32.totalorder %s42, %s45
      %p54 = scmp.eq.s32.totalorder %s23, 1
      %p55 = por %p53, %p54
      %p56 = scmp.ne.s32.totalorder %s45, %s46
      %p57 = scmp.eq.s32.totalorder %s23, 0
      %p58 = por %p56, %p57
      %p59 = scmp.ne.s32.totalorder %s45, %s46
      %p60 = scmp.eq.s32.totalorder %s24, 1
      %p61 = por %p59, %p60
      %p63 = scmp.ne.s32.totalorder %s46, %s62
      %p64 = scmp.eq.s32.totalorder %s24, 0
      %p65 = por %p63, %p64
      %s66 = ssub.s32 %s25, %s37
      %p67 = scmp.eq.s32.totalorder %s66, 0
      %s69 = sadd.s32 %s68, 1
      %s70 = scalar_select %p67, %s68, %s69
      %p73 = pneg %p67
      %p74 = scmp.eq.s32.totalorder %s18, 1
      %p75 = por %p73, %p74
      %p76 = scmp.ne.s32.totalorder %s68, %s71
      %p77 = scmp.eq.s32.totalorder %s18, 0
      %p78 = por %p76, %p77
      %p79 = scmp.ne.s32.totalorder %s68, %s71
      %p80 = scmp.eq.s32.totalorder %s23, 1
      %p81 = por %p79, %p80
      %p82 = scmp.ne.s32.totalorder %s71, %s72
      %p83 = scmp.eq.s32.totalorder %s23, 0
      %p84 = por %p82, %p83
      %p85 = scmp.ne.s32.totalorder %s71, %s72
      %p86 = scmp.eq.s32.totalorder %s24, 1
      %p87 = por %p85, %p86
      %p89 = scmp.ne.s32.totalorder %s72, %s88
      %p90 = scmp.eq.s32.totalorder %s24, 0
      %p91 = por %p89, %p90
      %s92 = ssub.s32 %s25, %s37
      %p93 = scmp.eq.s32.totalorder %s92, 0
      %s95 = sadd.s32 %s94, 1
      %s96 = scalar_select %p93, %s94, %s95
      %p99 = pneg %p93
      %p100 = scmp.eq.s32.totalorder %s18, 1
      %p101 = por %p99, %p100
      %p102 = scmp.ne.s32.totalorder %s94, %s97
      %p103 = scmp.eq.s32.totalorder %s18, 0
      %p104 = por %p102, %p103
      %p105 = scmp.ne.s32.totalorder %s94, %s97
      %p106 = scmp.eq.s32.totalorder %s23, 1
      %p107 = por %p105, %p106
      %p108 = scmp.ne.s32.totalorder %s97, %s98
      %p109 = scmp.eq.s32.totalorder %s23, 0
      %p110 = por %p108, %p109
      %p111 = scmp.ne.s32.totalorder %s97, %s98
      %p112 = scmp.eq.s32.totalorder %s24, 1
      %p113 = por %p111, %p112
      %p115 = scmp.ne.s32.totalorder %s98, %s114
      %p116 = scmp.eq.s32.totalorder %s24, 0
      %p117 = por %p115, %p116
      %s119 = sadd.s32 %s118, 1
      %p122 = scmp.eq.s32.totalorder %s18, 1
      %p123 = scmp.ne.s32.totalorder %s118, %s120
      %p124 = scmp.eq.s32.totalorder %s18, 0
      %p125 = por %p123, %p124
      %p126 = scmp.ne.s32.totalorder %s118, %s120
      %p127 = scmp.eq.s32.totalorder %s23, 1
      %p128 = por %p126, %p127
      %p129 = scmp.ne.s32.totalorder %s120, %s121
      %p130 = scmp.eq.s32.totalorder %s23, 0
      %p131 = por %p129, %p130
      %p132 = scmp.ne.s32.totalorder %s120, %s121
      %p133 = scmp.eq.s32.totalorder %s24, 1
      %p134 = por %p132, %p133
      %p136 = scmp.ne.s32.totalorder %s121, %s135
      %p137 = scmp.eq.s32.totalorder %s24, 0
      %p138 = por %p136, %p137
      %s140 = sadd.s32 %s139, 1
      %p143 = scmp.eq.s32.totalorder %s18, 1
      %p144 = scmp.ne.s32.totalorder %s139, %s141
      %p145 = scmp.eq.s32.totalorder %s18, 0
      %p146 = por %p144, %p145
      %p147 = scmp.ne.s32.totalorder %s139, %s141
      %p148 = scmp.eq.s32.totalorder %s23, 1
      %p149 = por %p147, %p148
      %p150 = scmp.ne.s32.totalorder %s141, %s142
      %p151 = scmp.eq.s32.totalorder %s23, 0
      %p152 = por %p150, %p151
      %p153 = scmp.ne.s32.totalorder %s141, %s142
      %p154 = scmp.eq.s32.totalorder %s24, 1
      %p155 = por %p153, %p154
      %p157 = scmp.ne.s32.totalorder %s142, %s156
      %p158 = scmp.eq.s32.totalorder %s24, 0
      %p159 = por %p157, %p158
      %s161 = sadd.s32 %s160, 1
      %p164 = scmp.eq.s32.totalorder %s18, 1
      %p165 = scmp.ne.s32.totalorder %s160, %s162
      %p166 = scmp.eq.s32.totalorder %s18, 0
      %p167 = por %p165, %p166
      %p168 = scmp.ne.s32.totalorder %s160, %s162
      %p169 = scmp.eq.s32.totalorder %s23, 1
      %p170 = por %p168, %p169
      %p171 = scmp.ne.s32.totalorder %s162, %s163
      %p172 = scmp.eq.s32.totalorder %s23, 0
      %p173 = por %p171, %p172
      %p174 = scmp.ne.s32.totalorder %s162, %s163
      %p175 = scmp.eq.s32.totalorder %s24, 1
      %p176 = por %p174, %p175
      %p178 = scmp.ne.s32.totalorder %s163, %s177
      %p179 = scmp.eq.s32.totalorder %s24, 0
      %p180 = por %p178, %p179
      %s181 = ssub.s32 %s25, %s37
      %s182 = ssub.s32 %s26, %s33
      %s183 = sor.u32 %s181, %s182
      %p184 = scmp.eq.s32.totalorder %s183, 0
      %s186 = sadd.s32 %s185, 1
      %s187 = scalar_select %p184, %s185, %s186
      %p190 = pneg %p184
      %p191 = scmp.eq.s32.totalorder %s18, 1
      %p192 = por %p190, %p191
      %p193 = scmp.ne.s32.totalorder %s185, %s188
      %p194 = scmp.eq.s32.totalorder %s18, 0
      %p195 = por %p193, %p194
      %p196 = scmp.ne.s32.totalorder %s185, %s188
      %p197 = scmp.eq.s32.totalorder %s23, 1
      %p198 = por %p196, %p197
      %p199 = scmp.ne.s32.totalorder %s188, %s189
      %p200 = scmp.eq.s32.totalorder %s23, 0
      %p201 = por %p199, %p200
      %p202 = scmp.ne.s32.totalorder %s188, %s189
      %p203 = scmp.eq.s32.totalorder %s24, 1
      %p204 = por %p202, %p203
      %p206 = scmp.ne.s32.totalorder %s189, %s205
      %p207 = scmp.eq.s32.totalorder %s24, 0
      %p208 = por %p206, %p207
      %p209 = scmp.le.s32.totalorder 1, %s18
      %p210 = scmp.lt.s32.totalorder %s18, 3
      %p211 = pnand %p209, %p210
      %p212 = pneg %p211
      // Predicated region
      $region9: #{tpu_custom_call.1} parent=5 // pred_check
        _
      $region10: #{tpu_custom_call.1} parent=5 // pred_check_branch
        %214 = sbr.rel (%p211) target = $region12
      $region11: #{tpu_custom_call.1} parent=5 // pred_region
        %s215 = ssub.s32 %s18, 1
        // Predicated region
        $region13: #{tpu_custom_call.1} parent=11 // pred_check
          %p216 = pneg %p131
        $region14: #{tpu_custom_call.1} parent=11 // pred_check_branch
          %218 = sbr.rel (%p216) target = $region16
        $region15: #{tpu_custom_call.1} parent=11 // pred_region
          _
        $region16: #{tpu_custom_call.1} parent=11 // pred_fallthru
          _
        // Predicated region
        $region17: #{tpu_custom_call.1} parent=11 // pred_check
          %p219 = pneg %p152
        $region18: #{tpu_custom_call.1} parent=11 // pred_check_branch
          %221 = sbr.rel (%p219) target = $region20
        $region19: #{tpu_custom_call.1} parent=11 // pred_region
          _
        $region20: #{tpu_custom_call.1} parent=11 // pred_fallthru
          _
        // Predicated region
        $region21: #{tpu_custom_call.1} parent=11 // pred_check
          %p222 = pneg %p173
        $region22: #{tpu_custom_call.1} parent=11 // pred_check_branch
          %224 = sbr.rel (%p222) target = $region24
        $region23: #{tpu_custom_call.1} parent=11 // pred_region
          _
        $region24: #{tpu_custom_call.1} parent=11 // pred_fallthru
          _
      $region12: #{tpu_custom_call.1} parent=5 // pred_fallthru
        _
      %p225 = scmp.lt.s32.totalorder %s18, 2
      // Predicated region
      $region25: #{tpu_custom_call.1} parent=5 // pred_check
        %p226 = pneg %p225
      $region26: #{tpu_custom_call.1} parent=5 // pred_check_branch
        %228 = sbr.rel (%p226) target = $region28
      $region27: #{tpu_custom_call.1} parent=5 // pred_region
        // Predicated region
        $region29: #{tpu_custom_call.1} parent=27 // pred_check
          %p229 = pneg %p52
        $region30: #{tpu_custom_call.1} parent=27 // pred_check_branch
          %231 = sbr.rel (%p229) target = $region32
        $region31: #{tpu_custom_call.1} parent=27 // pred_region
          %s232 = sand.u32 %s42, 1
          %s233 = scalar_lea.sflag [#allocation4], %s232
          %s234 = sand.u32 %s42, 1
          %s235 = smul.addr %s234, 8
          %s236 = scalar_lea.vmem [#allocation3], %s235
          %238 = vsyncadd %s233, 0
          %s239 = sadd.s32 %s26, %s25
          %s240 = smul.addr %s239, 8
          %s241 = scalar_lea.hbm %s0, %s240
          %s243 = sshll.u32 %s241, 4
          %s244 = int_to_ptr.hbm [resolvable:$true] %s243
          %s245 = sshll.u32 %s236, 4
          %s246 = int_to_ptr.vmem [resolvable:$true] %s245
          %248 = dma.hbm_to_vmem [thread:$0]  %s244, 128, %s246, %s233
        $region32: #{tpu_custom_call.1} parent=27 // pred_fallthru
          _
        // Predicated region
        $region33: #{tpu_custom_call.1} parent=27 // pred_check
          %p249 = pneg %p78
        $region34: #{tpu_custom_call.1} parent=27 // pred_check_branch
          %251 = sbr.rel (%p249) target = $region36
        $region35: #{tpu_custom_call.1} parent=27 // pred_region
          %p252 = scmp.lt.s32.totalorder %s25, 1
          %s253 = scalar_select %p252, %s25, 1
          %s254 = smul.addr %s253, 4
          %s255 = smul.addr %s254, 8
          %s256 = scalar_lea.vmem %s1, %s255
        $region36: #{tpu_custom_call.1} parent=27 // pred_fallthru
          _
        // Predicated region
        $region37: #{tpu_custom_call.1} parent=27 // pred_check
          %p257 = pneg %p104
        $region38: #{tpu_custom_call.1} parent=27 // pred_check_branch
          %259 = sbr.rel (%p257) target = $region40
        $region39: #{tpu_custom_call.1} parent=27 // pred_region
          %p260 = scmp.lt.s32.totalorder %s25, 1
          %s261 = scalar_select %p260, %s25, 1
          %s262 = smul.addr %s261, 2
          %s263 = smul.addr %s262, 8
          %s264 = scalar_lea.vmem %s2, %s263
        $region40: #{tpu_custom_call.1} parent=27 // pred_fallthru
          _
      $region28: #{tpu_custom_call.1} parent=5 // pred_fallthru
        _
      %p265 = scmp.le.s32.totalorder 1, %s18
      %p266 = scmp.lt.s32.totalorder %s18, 3
      %p267 = pnand %p265, %p266
      %p268 = pneg %p267
      // Predicated region
      $region41: #{tpu_custom_call.1} parent=5 // pred_check
        _
      $region42: #{tpu_custom_call.1} parent=5 // pred_check_branch
        %270 = sbr.rel (%p267) target = $region44
      $region43: #{tpu_custom_call.1} parent=5 // pred_region
        %s271 = ssub.s32 %s18, 1
        %s272 = sand.u32 %s45, 1
        %s273 = scalar_lea.sflag [#allocation4], %s272
        %s274 = sand.u32 %s45, 1
        %s275 = smul.addr %s274, 8
        %s276 = scalar_lea.vmem [#allocation3], %s275
        // Predicated region
        $region45: #{tpu_custom_call.1} parent=43 // pred_check
          %p277 = pneg %p58
        $region46: #{tpu_custom_call.1} parent=43 // pred_check_branch
          %279 = sbr.rel (%p277) target = $region48
        $region47: #{tpu_custom_call.1} parent=43 // pred_region
          %281 = dma.done %s273, 128
        $region48: #{tpu_custom_call.1} parent=43 // pred_fallthru
          _
        %s282 = sand.u32 %s45, 1
        %s283 = scalar_lea.sflag [#allocation4], %s282
        %s284 = sand.u32 %s45, 1
        %s285 = smul.addr %s284, 8
        %s286 = scalar_lea.vmem [#allocation3], %s285
        %p287 = pneg %p58
        %p288 = pneg %p55
        %p289 = scmp.lt.s32.totalorder %s27, 1
        %s290 = scalar_select %p289, %s27, 1
        %s291 = smul.addr %s290, 4
        %s292 = smul.addr %s291, 8
        %s293 = scalar_lea.vmem %s1, %s292
        %p294 = pneg %p84
        %p295 = pneg %p81
        %p296 = scmp.lt.s32.totalorder %s27, 1
        %s297 = scalar_select %p296, %s27, 1
        %s298 = smul.addr %s297, 2
        %s299 = smul.addr %s298, 8
        %s300 = scalar_lea.vmem %s2, %s299
        %p301 = pneg %p110
        %p302 = pneg %p107
        %p303 = pneg %p131
        %p304 = pneg %p128
        %p305 = pneg %p152
        %p306 = pneg %p149
        %p307 = pneg %p173
        %p308 = pneg %p170
        %p309 = pneg %p201
        %p310 = pneg %p198
        %s311 = sand.u32 %s188, 1
        %s312 = scalar_lea.sflag [#allocation5], %s311
        %s313 = sand.u32 %s188, 1
        %s314 = smul.addr %s313, 8
        %s315 = scalar_lea.vmem [#allocation6], %s314
        %p316 = scmp.lt.s32.totalorder %s27, 1
        %s317 = scalar_select %p316, %s27, 1
        %s318 = smul.addr %s317, 4
        %s319 = smul.addr %s318, 8
        %s320 = scalar_lea.vmem %s1, %s319
        %p321 = scmp.lt.s32.totalorder %s27, 1
        %s322 = scalar_select %p321, %s27, 1
        %s323 = smul.addr %s322, 2
        %s324 = smul.addr %s323, 8
        %s325 = scalar_lea.vmem %s2, %s324
        %v326 = vlaneseq
        %v327 = vand.u32 %v326, 127
        %v328 = vstv %s27
        %vm329 = vcmp.le.s32.totalorder %v327, %v328
        %v330 = vsel %vm329, 0.0, -inf
        %v331 = vld [vmem:[%s276] sm:$0xff]
        %v332 = vld [vmem:[%s3] sm:$0xff]
        %v333 = vld [vmem:[%s3 + $0x8] sm:$0xff]
        %v334 = vld [vmem:[%s3 + $0x10] sm:$0xff]
        %v335 = vld [vmem:[%s3 + $0x18] sm:$0xff]
        %vm336 = vcmask 261120
        %v338 = vsel %vm336, %v331, 0
        %340 = vmatpush.msra.mxu0 0.0
        %341 = vmatpush.msra.mxu0 0.0
        %342 = vmatpush.msra.mxu0 0.0
        %343 = vmatpush.msra.mxu0 0.0
        %344 = vmatpush.msra.mxu0 0.0
        %345 = vmatpush.msra.mxu0 0.0
        %346 = vmatpush.msra.mxu0 0.0
        %347 = vmatpush.msra.mxu0 0.0
        %348 = vmatpush.msra.mxu0 0.0
        %349 = vmatpush.msra.mxu0 0.0
        %350 = vmatpush.msra.mxu0 0.0
        %351 = vmatpush.msra.mxu0 0.0
        %352 = vmatpush.msra.mxu0 %v335
        %353 = vmatpush.msra.mxu0 %v334
        %354 = vmatpush.msra.mxu0 %v333
        %355 = vmatpush.msra.mxu0 %v332
        %356 = vmatmul.f32.gmra.mxu0 %v338
        %v357 = vpop.f32.mrf.mxu0
        %v358 = vadd.f32 0.0, %v357
        %359 = vdwg.mxu0
        %v360 = vld [vmem:[%s320] sm:$0xff]
        %v361 = vld [vmem:[%s320 + $0x8] sm:$0xff]
        %v362 = vld [vmem:[%s325] sm:$0xff]
        %vm363 = vcmask 130048
        %v365 = vsel %vm363, %v358, 0
        %367 = vmatpush.msra.mxu0 0.0
        %368 = vmatpush.msra.mxu0 0.0
        %369 = vmatpush.msra.mxu0 0.0
        %370 = vmatpush.msra.mxu0 0.0
        %371 = vmatpush.msra.mxu0 0.0
        %372 = vmatpush.msra.mxu0 0.0
        %373 = vmatpush.msra.mxu0 0.0
        %374 = vmatpush.msra.mxu0 0.0
        %375 = vmatpush.msra.mxu0 0.0
        %376 = vmatpush.msra.mxu0 0.0
        %377 = vmatpush.msra.mxu0 0.0
        %378 = vmatpush.msra.mxu0 0.0
        %379 = vmatpush.msra.mxu0 0.0
        %380 = vmatpush.msra.mxu0 0.0
        %381 = vmatpush.msra.mxu0 %v361
        %382 = vmatpush.msra.mxu0 %v360
        %383 = vmatmul.f32.gmra.mxu0 %v365
        %v384 = vpop.f32.mrf.mxu0
        %v385 = vadd.f32 %v330, %v384
        %386 = vdwg.mxu0
        %vm387 = vcmask 64512
        %v388 = vsel %vm387, %v385, -inf
        %389 = vmax.xlane.f32.xlu0 %v388
        %v390 = vpop.xlane.xlu0 %389
        %v391 = vsub.f32 %v385, %v390
        %v392 = vmul.f32 %v391, 1.442695
        %v393 = vpow.pop %v392
        %v394 = vsel %vm387, %v393, 0.0
        %395 = vadd.xlane.f32.xlu0 %v394
        %v396 = vpop.xlane.xlu0 %395
        %v398 = vsel %vm387, %v393, 0
        %400 = vmatpush.msra.mxu0 0.0
        %401 = vmatpush.msra.mxu0 0.0
        %402 = vmatpush.msra.mxu0 0.0
        %403 = vmatpush.msra.mxu0 0.0
        %404 = vmatpush.msra.mxu0 0.0
        %405 = vmatpush.msra.mxu0 0.0
        %406 = vmatpush.msra.mxu0 0.0
        %407 = vmatpush.msra.mxu0 0.0
        %408 = vmatpush.msra.mxu0 0.0
        %409 = vmatpush.msra.mxu0 0.0
        %410 = vmatpush.msra.mxu0 0.0
        %411 = vmatpush.msra.mxu0 0.0
        %412 = vmatpush.msra.mxu0 0.0
        %413 = vmatpush.msra.mxu0 0.0
        %414 = vmatpush.msra.mxu0 0.0
        %415 = vmatpush.msra.mxu0 %v362
        %416 = vmatmul.f32.gmra.mxu0 %v398
        %v417 = vpop.f32.mrf.mxu0
        %v418 = vadd.f32 0.0, %v417
        %419 = vdwg.mxu0
        %v420 = vrcp.pop %v396
        %v421 = vmul.f32 %v396, %v420
        %v422 = vsub.f32 1.0, %v421
        %v423 = vmul.f32 %v420, %v422
        %v424 = vadd.f32 %v420, %v423
        %vm425 = vweird.f32 %v396
        %vm426 = vweird.f32 %v420
        %vm427 = vmor %vm425, %vm426
        %v428 = vsel %vm427, %v420, %v424
        %v429 = vand.u32 2147483647, %v396
        %vm430 = vcmp.eq.f32.partialorder %v429, 8.507059e+37
        %v431 = vand.u32 %v396, 2147483648
        %v432 = vor.u32 1.1754944e-38, %v431
        %v433 = vsel %vm430, %v432, %v428
        %v434 = vmul.f32 %v418, %v433
        %435 = vst.msk [vmem:[#allocation2] sm:$0xff] %vm363, %v434
        %s436 = scalar_lea.vmem %s320, 16
        %v437 = vld [vmem:[%s436] sm:$0xff]
        %v438 = vld [vmem:[%s436 + $0x8] sm:$0xff]
        %s439 = scalar_lea.vmem %s325, 8
        %v440 = vld [vmem:[%s439] sm:$0xff]
        %441 = vrot.lane.b32.xlu0 %v358, 112
        %v442 = vpop.permute.xlu0 %441
        %v443 = vsel %vm363, %v442, 0
        %445 = vmatpush.msra.mxu0 0.0
        %446 = vmatpush.msra.mxu0 0.0
        %447 = vmatpush.msra.mxu0 0.0
        %448 = vmatpush.msra.mxu0 0.0
        %449 = vmatpush.msra.mxu0 0.0
        %450 = vmatpush.msra.mxu0 0.0
        %451 = vmatpush.msra.mxu0 0.0
        %452 = vmatpush.msra.mxu0 0.0
        %453 = vmatpush.msra.mxu0 0.0
        %454 = vmatpush.msra.mxu0 0.0
        %455 = vmatpush.msra.mxu0 0.0
        %456 = vmatpush.msra.mxu0 0.0
        %457 = vmatpush.msra.mxu0 0.0
        %458 = vmatpush.msra.mxu0 0.0
        %459 = vmatpush.msra.mxu0 %v438
        %460 = vmatpush.msra.mxu0 %v437
        %461 = vmatmul.f32.gmra.mxu0 %v443
        %v462 = vpop.f32.mrf.mxu0
        %v463 = vadd.f32 %v330, %v462
        %464 = vdwg.mxu0
        %v465 = vsel %vm387, %v463, -inf
        %466 = vmax.xlane.f32.xlu0 %v465
        %v467 = vpop.xlane.xlu0 %466
        %v468 = vsub.f32 %v463, %v467
        %v469 = vmul.f32 %v468, 1.442695
        %v470 = vpow.pop %v469
        %v471 = vsel %vm387, %v470, 0.0
        %472 = vadd.xlane.f32.xlu0 %v471
        %v473 = vpop.xlane.xlu0 %472
        %v475 = vsel %vm387, %v470, 0
        %477 = vmatpush.msra.mxu0 0.0
        %478 = vmatpush.msra.mxu0 0.0
        %479 = vmatpush.msra.mxu0 0.0
        %480 = vmatpush.msra.mxu0 0.0
        %481 = vmatpush.msra.mxu0 0.0
        %482 = vmatpush.msra.mxu0 0.0
        %483 = vmatpush.msra.mxu0 0.0
        %484 = vmatpush.msra.mxu0 0.0
        %485 = vmatpush.msra.mxu0 0.0
        %486 = vmatpush.msra.mxu0 0.0
        %487 = vmatpush.msra.mxu0 0.0
        %488 = vmatpush.msra.mxu0 0.0
        %489 = vmatpush.msra.mxu0 0.0
        %490 = vmatpush.msra.mxu0 0.0
        %491 = vmatpush.msra.mxu0 0.0
        %492 = vmatpush.msra.mxu0 %v440
        %493 = vmatmul.f32.gmra.mxu0 %v475
        %v494 = vpop.f32.mrf.mxu0
        %v495 = vadd.f32 0.0, %v494
        %496 = vdwg.mxu0
        %v497 = vrcp.pop %v473
        %v498 = vmul.f32 %v473, %v497
        %v499 = vsub.f32 1.0, %v498
        %v500 = vmul.f32 %v497, %v499
        %v501 = vadd.f32 %v497, %v500
        %vm502 = vweird.f32 %v473
        %vm503 = vweird.f32 %v497
        %vm504 = vmor %vm502, %vm503
        %v505 = vsel %vm504, %v497, %v501
        %v506 = vand.u32 2147483647, %v473
        %vm507 = vcmp.eq.f32.partialorder %v506, 8.507059e+37
        %v508 = vand.u32 %v473, 2147483648
        %v509 = vor.u32 1.1754944e-38, %v508
        %v510 = vsel %vm507, %v509, %v505
        %v511 = vmul.f32 %v495, %v510
        %513 = vrot.lane.b32.xlu0 %v511, 16
        %v514 = vpop.permute.xlu0 %513
        %vm516 = vcmask 261248
        %517 = vst.msk [vmem:[#allocation2] sm:$0xff] %vm516, %v514
        %v518 = vld [vmem:[#allocation2] sm:$0xff]
        %v519 = vld [vmem:[%s4] sm:$0xff]
        %v520 = vld [vmem:[%s4 + $0x8] sm:$0xff]
        %v521 = vld [vmem:[%s4 + $0x10] sm:$0xff]
        %v522 = vld [vmem:[%s4 + $0x18] sm:$0xff]
        %v523 = vld [vmem:[%s5] sm:$0x1]
        %v525 = vperm.slane %v523, 0
        %v528 = vsel %vm336, %v518, 0
        %530 = vmatpush.msra.mxu0 0.0
        %531 = vmatpush.msra.mxu0 0.0
        %532 = vmatpush.msra.mxu0 0.0
        %533 = vmatpush.msra.mxu0 0.0
        %534 = vmatpush.msra.mxu0 0.0
        %535 = vmatpush.msra.mxu0 0.0
        %536 = vmatpush.msra.mxu0 0.0
        %537 = vmatpush.msra.mxu0 0.0
        %538 = vmatpush.msra.mxu0 0.0
        %539 = vmatpush.msra.mxu0 0.0
        %540 = vmatpush.msra.mxu0 0.0
        %541 = vmatpush.msra.mxu0 0.0
        %542 = vmatpush.msra.mxu0 %v522
        %543 = vmatpush.msra.mxu0 %v521
        %544 = vmatpush.msra.mxu0 %v520
        %545 = vmatpush.msra.mxu0 %v519
        %546 = vmatmul.f32.gmra.mxu0 %v528
        %v547 = vpop.f32.mrf.mxu0
        %v548 = vadd.f32 %v525, %v547
        %549 = vdwg.mxu0
        %550 = vst.msk [vmem:[%s315] sm:$0xff] %vm336, %v548
        %s551 = sand.u32 %s188, 1
        %s552 = scalar_lea.sflag [#allocation5], %s551
        %s553 = sand.u32 %s188, 1
        %s554 = smul.addr %s553, 8
        %s555 = scalar_lea.vmem [#allocation6], %s554
        // Predicated region
        $region49: #{tpu_custom_call.1} parent=43 // pred_check
          %p556 = pneg %p198
        $region50: #{tpu_custom_call.1} parent=43 // pred_check_branch
          %558 = sbr.rel (%p556) target = $region52
        $region51: #{tpu_custom_call.1} parent=43 // pred_region
          %560 = vsyncadd %s552, 0
          %s561 = sadd.s32 %s28, %s27
          %s562 = smul.addr %s561, 8
          %s563 = scalar_lea.hbm %s6, %s562
          %s565 = sshll.u32 %s555, 4
          %s566 = int_to_ptr.vmem [resolvable:$true] %s565
          %s567 = sshll.u32 %s563, 4
          %s568 = int_to_ptr.hbm [resolvable:$true] %s567
          %570 = dma.vmem_to_hbm [thread:$0]  %s566, 128, %s568, %s552
        $region52: #{tpu_custom_call.1} parent=43 // pred_fallthru
          _
      $region44: #{tpu_custom_call.1} parent=5 // pred_fallthru
        _
      %p571 = scmp.le.s32.totalorder 2, %s18
      // Predicated region
      $region53: #{tpu_custom_call.1} parent=5 // pred_check
        %p572 = pneg %p571
      $region54: #{tpu_custom_call.1} parent=5 // pred_check_branch
        %574 = sbr.rel (%p572) target = $region56
      $region55: #{tpu_custom_call.1} parent=5 // pred_region
        %s575 = ssub.s32 %s18, 2
        // Predicated region
        $region57: #{tpu_custom_call.1} parent=55 // pred_check
          %p576 = pneg %p204
        $region58: #{tpu_custom_call.1} parent=55 // pred_check_branch
          %578 = sbr.rel (%p576) target = $region60
        $region59: #{tpu_custom_call.1} parent=55 // pred_region
          %s579 = sand.u32 %s189, 1
          %s580 = scalar_lea.sflag [#allocation5], %s579
          %s581 = sand.u32 %s189, 1
          %s582 = smul.addr %s581, 8
          %s583 = scalar_lea.vmem [#allocation6], %s582
          %585 = dma.done %s580, 128
        $region60: #{tpu_custom_call.1} parent=55 // pred_fallthru
          _
      $region56: #{tpu_custom_call.1} parent=5 // pred_fallthru
        _
    $region6: #{tpu_custom_call.1} parent=1 // loop_footer
      %s22 = sadd.s32 1, %s18
    $region7: #{tpu_custom_call.1} parent=1 // loop_footer_branch
      %17 = sbr.rel target = $region3
    $region8: #{tpu_custom_call.1} parent=1 // loop_exit
      _
    %586 = vsyncpa [#allocation4], 1
    %s587 = scalar_lea.sflag [#allocation4], 1
    %588 = vsyncpa %s587, 1
    %589 = vsyncpa [#allocation5], 1
    %s590 = scalar_lea.sflag [#allocation5], 1
    %591 = vsyncpa %s590, 1

</llo_original>
